<compile_context>
chip_gen: v7x
topology: tpu7x:2x2x1
jax: 0.10.0
libtpu: 0.0.40
codegen_flags: <defaults>
</compile_context>

<pallas_src>
import functools

import jax
import jax.numpy as jnp
from jax.experimental import pallas as pl
from jax.experimental.pallas import tpu as pltpu

LANE = 128


def _round_up(x, m):
    return ((x + m - 1) // m) * m


# ---------------------------------------------------------------------------
# Trace-time hardware detection (graceful fallback if the query fails).
# ---------------------------------------------------------------------------
def _tpu_flags():
    try:
        kind = jax.devices()[0].device_kind.lower()
    except Exception:  # pragma: no cover - defensive
        kind = ""
    is_v5e = ("v5e" in kind) or ("v5 lite" in kind) or ("v5litepod" in kind)
    num_tc = 2 if "v7" in kind else 1          # v7x: 2 TensorCores per chip
    return is_v5e, num_tc


_IS_V5E, _NUM_TC = _tpu_flags()
_EW_BF16 = not _IS_V5E                          # bf16 tanh/intermediates on v6e/v7x
_OUT_DTYPE = jnp.bfloat16 if _IS_V5E else jnp.float32   # halve writeback on v5e


# ---------------------------------------------------------------------------
# Pallas kernel: whole 4-layer MLP (matmuls + bias + tanh) fused, one batch tile.
# ---------------------------------------------------------------------------
def _student_mlp_kernel(x_ref,
                        w1_ref, b1_ref,
                        w2_ref, b2_ref,
                        w3_ref, b3_ref,
                        w4_ref, b4_ref,
                        out_ref, *, ew_bf16):
    def layer(h_bf16, w_ref, b_ref):
        y = jnp.dot(h_bf16, w_ref[...], preferred_element_type=jnp.float32) + b_ref[...]
        if ew_bf16:
            # v6e/v7x: bf16 EUP/VPU -> tanh in bf16, feeds next dot directly.
            return jnp.tanh(y.astype(jnp.bfloat16))
        # v5e: no bf16 VPU/EUP -> tanh in f32, single cast for the next matmul.
        return jnp.tanh(y).astype(jnp.bfloat16)

    h = x_ref[...].astype(jnp.bfloat16)
    h = layer(h, w1_ref, b1_ref)
    h = layer(h, w2_ref, b2_ref)
    h = layer(h, w3_ref, b3_ref)
    y = jnp.dot(h, w4_ref[...], preferred_element_type=jnp.float32) + b4_ref[...]
    out_ref[...] = y.astype(out_ref.dtype)


# ---------------------------------------------------------------------------
# Batch-tile selection: big tiles (amortize per-step overhead), >=2 tiles on
# multi-TC chips, and divisor tiles for large B so no pad copy of x is needed.
# ---------------------------------------------------------------------------
def _choose_tile(B, block_b, num_tc):
    B8 = _round_up(max(B, 8), 8)
    if B8 <= block_b:
        if num_tc > 1 and B8 >= 16:
            bb = _round_up((B8 + 1) // 2, 8)     # >=2 grid steps -> both TCs engage
        else:
            bb = B8                              # single tile, no padding
    else:
        # Prefer a large tile that divides B8 exactly (no jnp.pad HBM pass);
        # otherwise fall back to the full block and pad the tail.
        bb = block_b
        for cand in range(block_b, max(block_b // 8, 8) - 1, -8):
            if B8 % cand == 0:
                bb = cand
                break
    Bp = _round_up(B8, bb)
    return bb, Bp


# ---------------------------------------------------------------------------
# Wrapper: batch-tiled pallas_call with resident (padded, bf16) weights.
# ---------------------------------------------------------------------------
@functools.partial(jax.jit, static_argnames=("out_dim", "block_b"))
def student_forward(history, kparams, out_dim=10, block_b=2048):
    """history: (B, (obs_dim+action_dim)*len_history) f32 -> (B, out_dim) f32.

    kparams: output of prepare_params() — lane-padded bf16 weights, f32 biases.
    Note: inputs are cast to bf16 inside the kernel (intentional precision trade).
    """
    (w1, b1), (w2, b2), (w3, b3), (w4, b4) = kparams
    B, in_dim = history.shape
    out_pad = w4.shape[1]                        # 128 (lane-padded logits)

    bb, Bp = _choose_tile(B, block_b, _NUM_TC)
    x = history if Bp == B else jnp.pad(history, ((0, Bp - B), (0, 0)))

    grid = (Bp // bb,)

    def resident(arr):
        # Constant block index => Pallas keeps these operands VMEM-resident
        # across grid steps (no re-DMA after step 0).
        return pl.BlockSpec(arr.shape, lambda i: (0, 0))

    weight_bytes = sum(int(a.size) * a.dtype.itemsize
                       for (w, b) in kparams for a in (w, b))
    out_itemsize = jnp.dtype(_OUT_DTYPE).itemsize
    cost = pl.CostEstimate(
        flops=2 * Bp * sum(int(w.shape[0]) * int(w.shape[1]) for (w, _) in kparams),
        # padded hidden widths: tanh is evaluated over the full 128-lane tiles
        transcendentals=Bp * sum(int(w.shape[1]) for (w, _) in kparams[:-1]),
        bytes_accessed=int(x.size) * 4 + weight_bytes + Bp * out_pad * out_itemsize,
    )

    out = pl.pallas_call(
        functools.partial(_student_mlp_kernel, ew_bf16=_EW_BF16),
        out_shape=jax.ShapeDtypeStruct((Bp, out_pad), _OUT_DTYPE),
        grid=grid,
        in_specs=[
            pl.BlockSpec((bb, in_dim), lambda i: (i, 0)),    # x: batch-tiled
            resident(w1), resident(b1),
            resident(w2), resident(b2),
            resident(w3), resident(b3),
            resident(w4), resident(b4),
        ],
        out_specs=pl.BlockSpec((bb, out_pad), lambda i: (i, 0)),
        compiler_params=pltpu.CompilerParams(
            dimension_semantics=("parallel",)),              # megacore shard on v7x
        cost_estimate=cost,
    )(x, w1, b1, w2, b2, w3, b3, w4, b4)

    # Final slice (and, on v5e, the bf16->f32 cast fused into it).
    return out[:B, :out_dim].astype(jnp.float32)


# ---------------------------------------------------------------------------
# Parameter init (mirrors layer_init: orthogonal(std=sqrt(2)), bias=0) and the
# lane-padding / bf16 preparation for the kernel.
# ---------------------------------------------------------------------------
def init_params(key, in_dim):
    """Unpadded f32 params, weights stored (in_features, out_features)."""
    dims = [in_dim, 256, 128, 64, 10]
    ortho = jax.nn.initializers.orthogonal(scale=jnp.sqrt(2.0))
    params = []
    for d_in, d_out in zip(dims[:-1], dims[1:]):
        key, sub = jax.random.split(key)
        w_pt = ortho(sub, (d_out, d_in), jnp.float32)   # PyTorch (out, in)
        w = jnp.transpose(w_pt)                         # (in, out)
        b = jnp.zeros((1, d_out), jnp.float32)
        params.append((w, b))
    return tuple(params)


def prepare_params(params, lane=LANE):
    """Zero-pad out-dims (and chained in-dims) to lane multiples; cast W -> bf16."""
    padded = []
    prev_out_pad = None
    for (w, b) in params:
        d_in, d_out = w.shape
        in_pad = d_in if prev_out_pad is None else prev_out_pad
        out_pad = _round_up(d_out, lane)
        wp = jnp.zeros((in_pad, out_pad), jnp.float32).at[:d_in, :d_out].set(w)
        bp = jnp.zeros((1, out_pad), jnp.float32).at[:, :d_out].set(b)
        padded.append((wp.astype(jnp.bfloat16), bp))
        prev_out_pad = out_pad
    return tuple(padded)


# ---------------------------------------------------------------------------
# Pure-JAX references for correctness checks.
# ---------------------------------------------------------------------------
def _ref_forward_padded(history, kparams, out_dim=10, ew_bf16=True):
    """Mirrors the kernel's numerics (bf16 operands, f32 accumulation, and the
    same elementwise precision path)."""
    h = history.astype(jnp.bfloat16)
    n = len(kparams)
    y = None
    for i, (w, b) in enumerate(kparams):
        y = jnp.dot(h, w, preferred_element_type=jnp.float32) + b
        if i < n - 1:
            if ew_bf16:
                h = jnp.tanh(y.astype(jnp.bfloat16))
            else:
                h = jnp.tanh(y).astype(jnp.bfloat16)
    return y[:, :out_dim]


def _ref_forward_f32(history, params):
    """Full-precision reference on the unpadded params."""
    h = history
    n = len(params)
    for i, (w, b) in enumerate(params):
        h = h @ w + b
        if i < n - 1:
            h = jnp.tanh(h)
    return h


if __name__ == "__main__":
    key = jax.random.PRNGKey(0)

    # Shapes implied by the module: e.g. obs_dim=6, action_dim=2, len_history=4
    obs_dim, action_dim, len_history = 6, 2, 4
    in_dim = (obs_dim + action_dim) * len_history     # 32
    batch = 8

    k_x, k_p = jax.random.split(key)
    history = jax.random.normal(k_x, (batch, in_dim), jnp.float32)

    params = init_params(k_p, in_dim)          # f32 reference params
    kparams = prepare_params(params)           # padded bf16 kernel params

    out = student_forward(history, kparams)
    out = jax.block_until_ready(out)
    assert out.shape == (batch, 10), out.shape

    ref_matched = _ref_forward_padded(history, kparams, out_dim=10, ew_bf16=_EW_BF16)
    ref_f32 = _ref_forward_f32(history, params)
    assert jnp.allclose(out, ref_matched.astype(jnp.float32), atol=5e-2, rtol=5e-2), \
        "mismatch vs matched-precision reference"
    assert jnp.allclose(out, ref_f32, atol=2e-1, rtol=2e-1), \
        "mismatch vs f32 reference"

    print("KERNEL_OK")
</pallas_src>

<mosaic_0001>
module attributes {stable_mosaic.version = 11 : i64} {
  func.func @_student_mlp_kernel(%arg0: i32, %arg1: memref<8x32xf32, #tpu.memory_space<vmem>>, %arg2: memref<32x256xbf16, #tpu.memory_space<vmem>>, %arg3: memref<1x256xf32, #tpu.memory_space<vmem>>, %arg4: memref<256x128xbf16, #tpu.memory_space<vmem>>, %arg5: memref<1x128xf32, #tpu.memory_space<vmem>>, %arg6: memref<128x128xbf16, #tpu.memory_space<vmem>>, %arg7: memref<1x128xf32, #tpu.memory_space<vmem>>, %arg8: memref<128x128xbf16, #tpu.memory_space<vmem>>, %arg9: memref<1x128xf32, #tpu.memory_space<vmem>>, %arg10: memref<8x128xf32, #tpu.memory_space<vmem>>) attributes {dimension_semantics = [#tpu.dimension_semantics<parallel>], iteration_bounds = array<i64: 1>, scalar_prefetch = 0 : i64, scratch_operands = 0 : i64, tpu.core_type = #tpu.core_type<tc>, window_params = [{transform_indices = @transform_0, window_bounds = array<i64: 8, 32>}, {pipeline_mode = #tpu.pipeline_mode<synchronous>, transform_indices = @transform_1, window_bounds = array<i64: 32, 256>}, {pipeline_mode = #tpu.pipeline_mode<synchronous>, transform_indices = @transform_2, window_bounds = array<i64: 1, 256>}, {pipeline_mode = #tpu.pipeline_mode<synchronous>, transform_indices = @transform_3, window_bounds = array<i64: 256, 128>}, {pipeline_mode = #tpu.pipeline_mode<synchronous>, transform_indices = @transform_4, window_bounds = array<i64: 1, 128>}, {pipeline_mode = #tpu.pipeline_mode<synchronous>, transform_indices = @transform_5, window_bounds = array<i64: 128, 128>}, {pipeline_mode = #tpu.pipeline_mode<synchronous>, transform_indices = @transform_6, window_bounds = array<i64: 1, 128>}, {pipeline_mode = #tpu.pipeline_mode<synchronous>, transform_indices = @transform_7, window_bounds = array<i64: 128, 128>}, {pipeline_mode = #tpu.pipeline_mode<synchronous>, transform_indices = @transform_8, window_bounds = array<i64: 1, 128>}, {transform_indices = @transform_9, window_bounds = array<i64: 8, 128>}]} {
    %c0 = arith.constant 0 : index
    %c0_0 = arith.constant 0 : index
    %0 = vector.load %arg1[%c0, %c0_0] : memref<8x32xf32, #tpu.memory_space<vmem>>, vector<8x32xf32>
    %1 = arith.truncf %0 : vector<8x32xf32> to vector<8x32xbf16>
    %c0_1 = arith.constant 0 : index
    %c0_2 = arith.constant 0 : index
    %2 = vector.load %arg2[%c0_1, %c0_2] : memref<32x256xbf16, #tpu.memory_space<vmem>>, vector<32x256xbf16>
    %cst = arith.constant dense<0.000000e+00> : vector<8x256xf32>
    %3 = tpu.matmul %1, %2, %cst {dimension_numbers = #tpu.dot_dimension_numbers<[1], [0], [0], [1], [0, 0, 1, 1], [], []>} : vector<8x32xbf16>, vector<32x256xbf16>, vector<8x256xf32> -> vector<8x256xf32>
    %c0_3 = arith.constant 0 : index
    %c0_4 = arith.constant 0 : index
    %4 = vector.load %arg3[%c0_3, %c0_4] : memref<1x256xf32, #tpu.memory_space<vmem>>, vector<1x256xf32>
    %5 = vector.broadcast %4 : vector<1x256xf32> to vector<8x256xf32>
    %6 = arith.addf %3, %5 : vector<8x256xf32>
    %7 = arith.truncf %6 : vector<8x256xf32> to vector<8x256xbf16>
    %8 = math.tanh %7 : vector<8x256xbf16>
    %c0_5 = arith.constant 0 : index
    %c0_6 = arith.constant 0 : index
    %9 = vector.load %arg4[%c0_5, %c0_6] : memref<256x128xbf16, #tpu.memory_space<vmem>>, vector<256x128xbf16>
    %cst_7 = arith.constant dense<0.000000e+00> : vector<8x128xf32>
    %10 = tpu.matmul %8, %9, %cst_7 {dimension_numbers = #tpu.dot_dimension_numbers<[1], [0], [0], [1], [0, 0, 1, 1], [], []>} : vector<8x256xbf16>, vector<256x128xbf16>, vector<8x128xf32> -> vector<8x128xf32>
    %c0_8 = arith.constant 0 : index
    %c0_9 = arith.constant 0 : index
    %11 = vector.load %arg5[%c0_8, %c0_9] : memref<1x128xf32, #tpu.memory_space<vmem>>, vector<1x128xf32>
    %12 = vector.broadcast %11 : vector<1x128xf32> to vector<8x128xf32>
    %13 = arith.addf %10, %12 : vector<8x128xf32>
    %14 = arith.truncf %13 : vector<8x128xf32> to vector<8x128xbf16>
    %15 = math.tanh %14 : vector<8x128xbf16>
    %c0_10 = arith.constant 0 : index
    %c0_11 = arith.constant 0 : index
    %16 = vector.load %arg6[%c0_10, %c0_11] : memref<128x128xbf16, #tpu.memory_space<vmem>>, vector<128x128xbf16>
    %cst_12 = arith.constant dense<0.000000e+00> : vector<8x128xf32>
    %17 = tpu.matmul %15, %16, %cst_12 {dimension_numbers = #tpu.dot_dimension_numbers<[1], [0], [0], [1], [0, 0, 1, 1], [], []>} : vector<8x128xbf16>, vector<128x128xbf16>, vector<8x128xf32> -> vector<8x128xf32>
    %c0_13 = arith.constant 0 : index
    %c0_14 = arith.constant 0 : index
    %18 = vector.load %arg7[%c0_13, %c0_14] : memref<1x128xf32, #tpu.memory_space<vmem>>, vector<1x128xf32>
    %19 = vector.broadcast %18 : vector<1x128xf32> to vector<8x128xf32>
    %20 = arith.addf %17, %19 : vector<8x128xf32>
    %21 = arith.truncf %20 : vector<8x128xf32> to vector<8x128xbf16>
    %22 = math.tanh %21 : vector<8x128xbf16>
    %c0_15 = arith.constant 0 : index
    %c0_16 = arith.constant 0 : index
    %23 = vector.load %arg8[%c0_15, %c0_16] : memref<128x128xbf16, #tpu.memory_space<vmem>>, vector<128x128xbf16>
    %cst_17 = arith.constant dense<0.000000e+00> : vector<8x128xf32>
    %24 = tpu.matmul %22, %23, %cst_17 {dimension_numbers = #tpu.dot_dimension_numbers<[1], [0], [0], [1], [0, 0, 1, 1], [], []>} : vector<8x128xbf16>, vector<128x128xbf16>, vector<8x128xf32> -> vector<8x128xf32>
    %c0_18 = arith.constant 0 : index
    %c0_19 = arith.constant 0 : index
    %25 = vector.load %arg9[%c0_18, %c0_19] : memref<1x128xf32, #tpu.memory_space<vmem>>, vector<1x128xf32>
    %26 = vector.broadcast %25 : vector<1x128xf32> to vector<8x128xf32>
    %27 = arith.addf %24, %26 : vector<8x128xf32>
    %c0_20 = arith.constant 0 : index
    %c0_21 = arith.constant 0 : index
    %28 = vector.load %arg10[%c0_20, %c0_21] : memref<8x128xf32, #tpu.memory_space<vmem>>, vector<8x128xf32>
    tpu.vector_store %arg10[%c0_20, %c0_21], %27 {strides = array<i32>} : memref<8x128xf32, #tpu.memory_space<vmem>>, vector<8x128xf32>,
    return
  }
  func.func @transform_0(%arg0: i32) -> (i32, i32) {
    %c0_i32 = arith.constant 0 : i32
    %c0_i32_0 = arith.constant 0 : i32
    return %arg0, %c0_i32 : i32, i32
  }
  func.func @transform_1(%arg0: i32) -> (i32, i32) {
    %c0_i32 = arith.constant 0 : i32
    %c0_i32_0 = arith.constant 0 : i32
    %c0_i32_1 = arith.constant 0 : i32
    return %c0_i32, %c0_i32_0 : i32, i32
  }
  func.func @transform_2(%arg0: i32) -> (i32, i32) {
    %c0_i32 = arith.constant 0 : i32
    %c0_i32_0 = arith.constant 0 : i32
    %c0_i32_1 = arith.constant 0 : i32
    return %c0_i32, %c0_i32_0 : i32, i32
  }
  func.func @transform_3(%arg0: i32) -> (i32, i32) {
    %c0_i32 = arith.constant 0 : i32
    %c0_i32_0 = arith.constant 0 : i32
    %c0_i32_1 = arith.constant 0 : i32
    return %c0_i32, %c0_i32_0 : i32, i32
  }
  func.func @transform_4(%arg0: i32) -> (i32, i32) {
    %c0_i32 = arith.constant 0 : i32
    %c0_i32_0 = arith.constant 0 : i32
    %c0_i32_1 = arith.constant 0 : i32
    return %c0_i32, %c0_i32_0 : i32, i32
  }
  func.func @transform_5(%arg0: i32) -> (i32, i32) {
    %c0_i32 = arith.constant 0 : i32
    %c0_i32_0 = arith.constant 0 : i32
    %c0_i32_1 = arith.constant 0 : i32
    return %c0_i32, %c0_i32_0 : i32, i32
  }
  func.func @transform_6(%arg0: i32) -> (i32, i32) {
    %c0_i32 = arith.constant 0 : i32
    %c0_i32_0 = arith.constant 0 : i32
    %c0_i32_1 = arith.constant 0 : i32
    return %c0_i32, %c0_i32_0 : i32, i32
  }
  func.func @transform_7(%arg0: i32) -> (i32, i32) {
    %c0_i32 = arith.constant 0 : i32
    %c0_i32_0 = arith.constant 0 : i32
    %c0_i32_1 = arith.constant 0 : i32
    return %c0_i32, %c0_i32_0 : i32, i32
  }
  func.func @transform_8(%arg0: i32) -> (i32, i32) {
    %c0_i32 = arith.constant 0 : i32
    %c0_i32_0 = arith.constant 0 : i32
    %c0_i32_1 = arith.constant 0 : i32
    return %c0_i32, %c0_i32_0 : i32, i32
  }
  func.func @transform_9(%arg0: i32) -> (i32, i32) {
    %c0_i32 = arith.constant 0 : i32
    %c0_i32_0 = arith.constant 0 : i32
    return %arg0, %c0_i32 : i32, i32
  }
}

</mosaic_0001>

<llo_original>
// kernel: student_forward.1
$region0: #{student_forward.1}
  #allocation0 [shape = 'u32[]', space=smem, size = 0x4, offset = 0x4, fixed_abs, tag = 'smem constant byte address 0x4 - core index']
  #allocation1 [shape = 'u32[144,128]{1,0:T(1,128)}', space=vmem, size = 0x12000, scoped, tag = 'internal scratch']
  %s0 = inlined_call_operand.hbm [shape: f32[8,32], index: 0, kind: input, shape index: {}]
  %s1 = inlined_call_operand.hbm [shape: bf16[32,256], index: 1, kind: input, shape index: {}]
  %s2 = inlined_call_operand.vmem [shape: f32[1,256], index: 2, kind: input, shape index: {}]
  %s3 = inlined_call_operand.hbm [shape: bf16[256,128], index: 3, kind: input, shape index: {}]
  %s4 = inlined_call_operand.vmem [shape: f32[1,128], index: 4, kind: input, shape index: {}]
  %s5 = inlined_call_operand.hbm [shape: bf16[128,128], index: 5, kind: input, shape index: {}]
  %s6 = inlined_call_operand.vmem [shape: f32[1,128], index: 6, kind: input, shape index: {}]
  %s7 = inlined_call_operand.hbm [shape: bf16[128,128], index: 7, kind: input, shape index: {}]
  %s8 = inlined_call_operand.vmem [shape: f32[1,128], index: 8, kind: input, shape index: {}]
  %s9 = inlined_call_operand.hbm [shape: f32[8,128], index: 9, kind: output, shape index: {}]
  %s10 = sld [smem:[#allocation0]]
  $region66: #{student_forward.1} parent=0
    _
  %s12 = ssub.s32 1, %s10
  %s13 = scalar_select 0, %s12, %s10
  $region1: #{student_forward.1} parent=0
    #allocation2 [shape = 'u8[4096]{0}', space=vmem, size = 0x1000, scoped, tag = 'input window, operand 0, single buffered']
    #allocation3 [shape = 's32[1]{0}', space=sflag, size = 0x4, scoped, tag = 'scoped memory for student_forward.1']
    #allocation4 [shape = 's32[1]{0}', space=sflag, size = 0x4, scoped, tag = 'scoped memory for student_forward.1']
    #allocation5 [shape = 'u8[16384]{0}', space=vmem, size = 0x4000, scoped, tag = 'input window, operand 1, single buffered']
    #allocation6 [shape = 's32[1]{0}', space=sflag, size = 0x4, scoped, tag = 'scoped memory for student_forward.1']
    #allocation7 [shape = 'u8[65536]{0}', space=vmem, size = 0x10000, scoped, tag = 'input window, operand 3, single buffered']
    #allocation8 [shape = 'u8[32768]{0}', space=vmem, size = 0x8000, scoped, tag = 'input window, operand 5, single buffered']
    #allocation9 [shape = 's32[1]{0}', space=sflag, size = 0x4, scoped, tag = 'scoped memory for student_forward.1']
    #allocation10 [shape = 'u8[32768]{0}', space=vmem, size = 0x8000, scoped, tag = 'input window, operand 7, single buffered']
    #allocation11 [shape = 'u8[4096]{0}', space=vmem, size = 0x1000, scoped, tag = 'output window, operand 0, single buffered']
    %14 = vsyncpa [#allocation3], 0
    %15 = vsyncpa [#allocation6], 0
    %16 = vsyncpa [#allocation9], 0
    %17 = vsyncpa [#allocation4], 0
    // Predicated region
    $region2: #{student_forward.1} parent=1 // pred_check
      _
    $region3: #{student_forward.1} parent=1 // pred_check_branch
      %19 = sbr.rel (0) target = $region5
    $region4: #{student_forward.1} parent=1 // pred_region
      %s21 = ssub.s32 128, 128
      %22 = vsyncadd [#allocation3], %s21
      %s24 = sshll.u32 [#allocation2], 4
      %s25 = int_to_ptr.vmem [resolvable:$true] %s24
      %27 = dma.hbm_to_vmem [thread:$0]  %s0, 128, %s25, [#allocation3]
    $region5: #{student_forward.1} parent=1 // pred_fallthru
      _
    // Predicated region
    $region6: #{student_forward.1} parent=1 // pred_check
      _
    $region7: #{student_forward.1} parent=1 // pred_check_branch
      %29 = sbr.rel (0) target = $region9
    $region8: #{student_forward.1} parent=1 // pred_region
      %s31 = ssub.s32 512, 512
      %32 = vsyncadd [#allocation6], %s31
      %s33 = sshll.u32 [#allocation5], 4
      %s34 = int_to_ptr.vmem [resolvable:$true] %s33
      %39 = dma.hbm_to_vmem [thread:$0]  %s1, 512, %s34, [#allocation6], 128, 128, 8
    $region9: #{student_forward.1} parent=1 // pred_fallthru
      _
    // Predicated region
    $region10: #{student_forward.1} parent=1 // pred_check
      _
    $region11: #{student_forward.1} parent=1 // pred_check_branch
      %41 = sbr.rel (0) target = $region13
    $region12: #{student_forward.1} parent=1 // pred_region
      _
    $region13: #{student_forward.1} parent=1 // pred_fallthru
      _
    // Predicated region
    $region14: #{student_forward.1} parent=1 // pred_check
      _
    $region15: #{student_forward.1} parent=1 // pred_check_branch
      %43 = sbr.rel (0) target = $region17
    $region16: #{student_forward.1} parent=1 // pred_region
      %s45 = ssub.s32 2048, 2048
      %46 = vsyncadd [#allocation6], %s45
      %s47 = sshll.u32 [#allocation7], 4
      %s48 = int_to_ptr.vmem [resolvable:$true] %s47
      %53 = dma.hbm_to_vmem [thread:$0]  %s3, 2048, %s48, [#allocation6], 64, 64, 4
    $region17: #{student_forward.1} parent=1 // pred_fallthru
      _
    // Predicated region
    $region18: #{student_forward.1} parent=1 // pred_check
      _
    $region19: #{student_forward.1} parent=1 // pred_check_branch
      %55 = sbr.rel (0) target = $region21
    $region20: #{student_forward.1} parent=1 // pred_region
      _
    $region21: #{student_forward.1} parent=1 // pred_fallthru
      _
    // Predicated region
    $region22: #{student_forward.1} parent=1 // pred_check
      _
    $region23: #{student_forward.1} parent=1 // pred_check_branch
      %57 = sbr.rel (0) target = $region25
    $region24: #{student_forward.1} parent=1 // pred_region
      %s59 = ssub.s32 1024, 1024
      %60 = vsyncadd [#allocation9], %s59
      %s61 = sshll.u32 [#allocation8], 4
      %s62 = int_to_ptr.vmem [resolvable:$true] %s61
      %67 = dma.hbm_to_vmem [thread:$0]  %s5, 1024, %s62, [#allocation9], 64, 64, 4
    $region25: #{student_forward.1} parent=1 // pred_fallthru
      _
    // Predicated region
    $region26: #{student_forward.1} parent=1 // pred_check
      _
    $region27: #{student_forward.1} parent=1 // pred_check_branch
      %69 = sbr.rel (0) target = $region29
    $region28: #{student_forward.1} parent=1 // pred_region
      _
    $region29: #{student_forward.1} parent=1 // pred_fallthru
      _
    // Predicated region
    $region30: #{student_forward.1} parent=1 // pred_check
      _
    $region31: #{student_forward.1} parent=1 // pred_check_branch
      %71 = sbr.rel (0) target = $region33
    $region32: #{student_forward.1} parent=1 // pred_region
      %s73 = ssub.s32 1024, 1024
      %74 = vsyncadd [#allocation9], %s73
      %s75 = sshll.u32 [#allocation10], 4
      %s76 = int_to_ptr.vmem [resolvable:$true] %s75
      %81 = dma.hbm_to_vmem [thread:$0]  %s7, 1024, %s76, [#allocation9], 64, 64, 4
    $region33: #{student_forward.1} parent=1 // pred_fallthru
      _
    // Predicated region
    $region34: #{student_forward.1} parent=1 // pred_check
      _
    $region35: #{student_forward.1} parent=1 // pred_check_branch
      %83 = sbr.rel (0) target = $region37
    $region36: #{student_forward.1} parent=1 // pred_region
      _
    $region37: #{student_forward.1} parent=1 // pred_fallthru
      _
    // Predicated region
    $region38: #{student_forward.1} parent=1 // pred_check
      _
    $region39: #{student_forward.1} parent=1 // pred_check_branch
      %85 = sbr.rel (0) target = $region41
    $region40: #{student_forward.1} parent=1 // pred_region
      %86 = dma.done [#allocation3], 128
    $region41: #{student_forward.1} parent=1 // pred_fallthru
      _
    // Predicated region
    $region42: #{student_forward.1} parent=1 // pred_check
      _
    $region43: #{student_forward.1} parent=1 // pred_check_branch
      %88 = sbr.rel (0) target = $region45
    $region44: #{student_forward.1} parent=1 // pred_region
      %89 = dma.done [#allocation6], 512
    $region45: #{student_forward.1} parent=1 // pred_fallthru
      _
    // Predicated region
    $region46: #{student_forward.1} parent=1 // pred_check
      _
    $region47: #{student_forward.1} parent=1 // pred_check_branch
      %91 = sbr.rel (0) target = $region49
    $region48: #{student_forward.1} parent=1 // pred_region
      %92 = dma.done [#allocation6], 2048
    $region49: #{student_forward.1} parent=1 // pred_fallthru
      _
    // Predicated region
    $region50: #{student_forward.1} parent=1 // pred_check
      _
    $region51: #{student_forward.1} parent=1 // pred_check_branch
      %94 = sbr.rel (0) target = $region53
    $region52: #{student_forward.1} parent=1 // pred_region
      %95 = dma.done [#allocation9], 1024
    $region53: #{student_forward.1} parent=1 // pred_fallthru
      _
    // Predicated region
    $region54: #{student_forward.1} parent=1 // pred_check
      _
    $region55: #{student_forward.1} parent=1 // pred_check_branch
      %97 = sbr.rel (0) target = $region57
    $region56: #{student_forward.1} parent=1 // pred_region
      %98 = dma.done [#allocation9], 1024
    $region57: #{student_forward.1} parent=1 // pred_fallthru
      _
    %v100 = vld [vmem:[#allocation2] sm:$0xff]
    %v101 = vpack.c.bf16 %v100, %v100
    %v102 = vld [vmem:[#allocation5] sm:$0xff]
    %v103 = vld [vmem:[#allocation5 + $0x8] sm:$0xff]
    %v104 = vld [vmem:[#allocation5 + $0x10] sm:$0xff]
    %v105 = vld [vmem:[#allocation5 + $0x18] sm:$0xff]
    %v106 = vld [vmem:[%s2] sm:$0x3]
    %v108 = vlaneseq
    %v109 = vshrl.u32 %v108, 7
    %v110 = vsub.s32 0, %v109
    %v111 = vrot.slane %v106, %v110
    %v112 = vlaneseq
    %v113 = vshrl.u32 %v112, 7
    %v114 = vsub.s32 1, %v113
    %v115 = vrot.slane %v106, %v114
    %v122 = vunpack.c.l.b16 %v102
    %v123 = vunpack.c.h.b16 %v102
    %v124 = vunpack.c.l.b16 %v103
    %v125 = vunpack.c.h.b16 %v103
    %v126 = vunpack.c.l.b16 %v104
    %v127 = vunpack.c.h.b16 %v104
    %v128 = vunpack.c.l.b16 %v105
    %v129 = vunpack.c.h.b16 %v105
    %v130 = vpack.c.b16 %v124, %v122
    %v131 = vpack.c.b16 %v125, %v123
    %v132 = vpack.c.b16 %v128, %v126
    %v133 = vpack.c.b16 %v129, %v127
    %vm138 = vcmask 261120
    %v140 = vsel %vm138, %v101, 0
    %142 = vmatprep.subr.bf16.mxu0 %v131
    %143 = vmatpush1.bf16.msra.mxu0 %v130
    %144 = vmatprep.subr.bf16.mxu0 %v133
    %145 = vmatpush1.bf16.msra.mxu0 %v132
    %146 = vmatprep.subr.bf16.mxu0 0
    %147 = vmatpush1.bf16.msra.mxu0 0
    %148 = vmatprep.subr.bf16.mxu0 0
    %149 = vmatpush1.bf16.msra.mxu0 0
    %150 = vmatprep.subr.bf16.mxu0 0
    %151 = vmatpush1.bf16.msra.mxu0 0
    %152 = vmatprep.subr.bf16.mxu0 0
    %153 = vmatpush1.bf16.msra.mxu0 0
    %154 = vmatprep.subr.bf16.mxu0 0
    %155 = vmatpush1.bf16.msra.mxu0 0
    %156 = vmatprep.subr.bf16.mxu0 0
    %157 = vmatpush1.bf16.msra.mxu0 0
    %158 = vmatprep.subr.bf16.mxu0 0
    %159 = vmatpush1.bf16.msra.mxu0 0
    %160 = vmatprep.subr.bf16.mxu0 0
    %161 = vmatpush1.bf16.msra.mxu0 0
    %162 = vmatprep.subr.bf16.mxu0 0
    %163 = vmatpush1.bf16.msra.mxu0 0
    %164 = vmatprep.subr.bf16.mxu0 0
    %165 = vmatpush1.bf16.msra.mxu0 0
    %166 = vmatprep.subr.bf16.mxu0 0
    %167 = vmatpush1.bf16.msra.mxu0 0
    %168 = vmatprep.subr.bf16.mxu0 0
    %169 = vmatpush1.bf16.msra.mxu0 0
    %170 = vmatprep.subr.bf16.mxu0 0
    %171 = vmatpush1.bf16.msra.mxu0 0
    %172 = vmatprep.subr.bf16.mxu0 0
    %173 = vmatpush1.bf16.msra.mxu0 0
    %174 = vmatprep.mubr.bf16.mxu0 0
    %175 = vmatmul.mubr.bf16.gmra.mrb[0].mxu0 %v140
    %v176 = vpop.f32.mrb[0].mxu0
    %v177 = vadd.f32 %v111, %v176
    %v178 = vpop.f32.mrb[0].mxu0
    %v179 = vadd.f32 %v115, %v178
    %v180 = vpop.f32.mrb[0].mxu0
    %v181 = vpop.f32.mrb[0].mxu0
    %182 = vdwg.mxu0
    %v183 = vpack.c.bf16 %v177, %v177
    %v184 = vpack.c.bf16 %v179, %v179
    %v185 = vtanh.bf16.pop %v183
    %v186 = vtanh.bf16.pop %v184
    %v187 = vld [vmem:[#allocation7] sm:$0xf]
    %v188 = vld [vmem:[#allocation7 + $0x4] sm:$0xf]
    %v189 = vld [vmem:[#allocation7 + $0x8] sm:$0xf]
    %v190 = vld [vmem:[#allocation7 + $0xc] sm:$0xf]
    %v191 = vld [vmem:[#allocation7 + $0x10] sm:$0xf]
    %v192 = vld [vmem:[#allocation7 + $0x14] sm:$0xf]
    %v193 = vld [vmem:[#allocation7 + $0x18] sm:$0xf]
    %v194 = vld [vmem:[#allocation7 + $0x1c] sm:$0xf]
    %v195 = vld [vmem:[#allocation7 + $0x20] sm:$0xf]
    %v196 = vld [vmem:[#allocation7 + $0x24] sm:$0xf]
    %v197 = vld [vmem:[#allocation7 + $0x28] sm:$0xf]
    %v198 = vld [vmem:[#allocation7 + $0x2c] sm:$0xf]
    %v199 = vld [vmem:[#allocation7 + $0x30] sm:$0xf]
    %v200 = vld [vmem:[#allocation7 + $0x34] sm:$0xf]
    %v201 = vld [vmem:[#allocation7 + $0x38] sm:$0xf]
    %v202 = vld [vmem:[#allocation7 + $0x3c] sm:$0xf]
    %v203 = vld [vmem:[#allocation7 + $0x40] sm:$0xf]
    %v204 = vld [vmem:[#allocation7 + $0x44] sm:$0xf]
    %v205 = vld [vmem:[#allocation7 + $0x48] sm:$0xf]
    %v206 = vld [vmem:[#allocation7 + $0x4c] sm:$0xf]
    %v207 = vld [vmem:[#allocation7 + $0x50] sm:$0xf]
    %v208 = vld [vmem:[#allocation7 + $0x54] sm:$0xf]
    %v209 = vld [vmem:[#allocation7 + $0x58] sm:$0xf]
    %v210 = vld [vmem:[#allocation7 + $0x5c] sm:$0xf]
    %v211 = vld [vmem:[#allocation7 + $0x60] sm:$0xf]
    %v212 = vld [vmem:[#allocation7 + $0x64] sm:$0xf]
    %v213 = vld [vmem:[#allocation7 + $0x68] sm:$0xf]
    %v214 = vld [vmem:[#allocation7 + $0x6c] sm:$0xf]
    %v215 = vld [vmem:[#allocation7 + $0x70] sm:$0xf]
    %v216 = vld [vmem:[#allocation7 + $0x74] sm:$0xf]
    %v217 = vld [vmem:[#allocation7 + $0x78] sm:$0xf]
    %v218 = vld [vmem:[#allocation7 + $0x7c] sm:$0xf]
    %v219 = vld [vmem:[%s4] sm:$0x1]
    %v221 = vlaneseq
    %v222 = vshrl.u32 %v221, 7
    %v223 = vsub.s32 0, %v222
    %v224 = vrot.slane %v219, %v223
    %v258 = vunpack.c.l.b16 %v187
    %v259 = vunpack.c.l.b16 %v188
    %v260 = vunpack.c.l.b16 %v189
    %v261 = vunpack.c.l.b16 %v190
    %v262 = vunpack.c.l.b16 %v191
    %v263 = vunpack.c.l.b16 %v192
    %v264 = vunpack.c.l.b16 %v193
    %v265 = vunpack.c.l.b16 %v194
    %v266 = vunpack.c.l.b16 %v195
    %v267 = vunpack.c.l.b16 %v196
    %v268 = vunpack.c.l.b16 %v197
    %v269 = vunpack.c.l.b16 %v198
    %v270 = vunpack.c.l.b16 %v199
    %v271 = vunpack.c.l.b16 %v200
    %v272 = vunpack.c.l.b16 %v201
    %v273 = vunpack.c.l.b16 %v202
    %v274 = vunpack.c.l.b16 %v203
    %v275 = vunpack.c.l.b16 %v204
    %v276 = vunpack.c.l.b16 %v205
    %v277 = vunpack.c.l.b16 %v206
    %v278 = vunpack.c.l.b16 %v207
    %v279 = vunpack.c.l.b16 %v208
    %v280 = vunpack.c.l.b16 %v209
    %v281 = vunpack.c.l.b16 %v210
    %v282 = vunpack.c.l.b16 %v211
    %v283 = vunpack.c.l.b16 %v212
    %v284 = vunpack.c.l.b16 %v213
    %v285 = vunpack.c.l.b16 %v214
    %v286 = vunpack.c.l.b16 %v215
    %v287 = vunpack.c.l.b16 %v216
    %v288 = vunpack.c.l.b16 %v217
    %v289 = vunpack.c.l.b16 %v218
    %v290 = vpack.c.b16 %v259, %v258
    %v291 = vpack.c.b16 %v261, %v260
    %v292 = vpack.c.b16 %v263, %v262
    %v293 = vpack.c.b16 %v265, %v264
    %v294 = vpack.c.b16 %v267, %v266
    %v295 = vpack.c.b16 %v269, %v268
    %v296 = vpack.c.b16 %v271, %v270
    %v297 = vpack.c.b16 %v273, %v272
    %v298 = vpack.c.b16 %v275, %v274
    %v299 = vpack.c.b16 %v277, %v276
    %v300 = vpack.c.b16 %v279, %v278
    %v301 = vpack.c.b16 %v281, %v280
    %v302 = vpack.c.b16 %v283, %v282
    %v303 = vpack.c.b16 %v285, %v284
    %v304 = vpack.c.b16 %v287, %v286
    %v305 = vpack.c.b16 %v289, %v288
    %322 = vmatprep.subr.bf16.mxu0 0
    %323 = vmatpush1.bf16.msra.mxu0 %v290
    %324 = vmatprep.subr.bf16.mxu0 0
    %325 = vmatpush1.bf16.msra.mxu0 %v291
    %326 = vmatprep.subr.bf16.mxu0 0
    %327 = vmatpush1.bf16.msra.mxu0 %v292
    %328 = vmatprep.subr.bf16.mxu0 0
    %329 = vmatpush1.bf16.msra.mxu0 %v293
    %330 = vmatprep.subr.bf16.mxu0 0
    %331 = vmatpush1.bf16.msra.mxu0 %v294
    %332 = vmatprep.subr.bf16.mxu0 0
    %333 = vmatpush1.bf16.msra.mxu0 %v295
    %334 = vmatprep.subr.bf16.mxu0 0
    %335 = vmatpush1.bf16.msra.mxu0 %v296
    %336 = vmatprep.subr.bf16.mxu0 0
    %337 = vmatpush1.bf16.msra.mxu0 %v297
    %338 = vmatprep.subr.bf16.mxu0 0
    %339 = vmatpush1.bf16.msra.mxu0 %v298
    %340 = vmatprep.subr.bf16.mxu0 0
    %341 = vmatpush1.bf16.msra.mxu0 %v299
    %342 = vmatprep.subr.bf16.mxu0 0
    %343 = vmatpush1.bf16.msra.mxu0 %v300
    %344 = vmatprep.subr.bf16.mxu0 0
    %345 = vmatpush1.bf16.msra.mxu0 %v301
    %346 = vmatprep.subr.bf16.mxu0 0
    %347 = vmatpush1.bf16.msra.mxu0 %v302
    %348 = vmatprep.subr.bf16.mxu0 0
    %349 = vmatpush1.bf16.msra.mxu0 %v303
    %350 = vmatprep.subr.bf16.mxu0 0
    %351 = vmatpush1.bf16.msra.mxu0 %v304
    %352 = vmatprep.subr.bf16.mxu0 0
    %353 = vmatpush1.bf16.msra.mxu0 %v305
    %354 = vmatprep.mubr.bf16.mxu0 %v186
    %355 = vmatmul.mubr.bf16.gmra.mrb[0].mxu0 %v185
    %v356 = vpop.f32.mrb[0].mxu0
    %v357 = vadd.f32 %v224, %v356
    %v358 = vpop.f32.mrb[0].mxu0
    %v359 = vpop.f32.mrb[0].mxu0
    %v360 = vpop.f32.mrb[0].mxu0
    %361 = vdwg.mxu0
    %v362 = vpack.c.bf16 %v357, %v357
    %v363 = vtanh.bf16.pop %v362
    %v364 = vld [vmem:[#allocation8] sm:$0xf]
    %v365 = vld [vmem:[#allocation8 + $0x4] sm:$0xf]
    %v366 = vld [vmem:[#allocation8 + $0x8] sm:$0xf]
    %v367 = vld [vmem:[#allocation8 + $0xc] sm:$0xf]
    %v368 = vld [vmem:[#allocation8 + $0x10] sm:$0xf]
    %v369 = vld [vmem:[#allocation8 + $0x14] sm:$0xf]
    %v370 = vld [vmem:[#allocation8 + $0x18] sm:$0xf]
    %v371 = vld [vmem:[#allocation8 + $0x1c] sm:$0xf]
    %v372 = vld [vmem:[#allocation8 + $0x20] sm:$0xf]
    %v373 = vld [vmem:[#allocation8 + $0x24] sm:$0xf]
    %v374 = vld [vmem:[#allocation8 + $0x28] sm:$0xf]
    %v375 = vld [vmem:[#allocation8 + $0x2c] sm:$0xf]
    %v376 = vld [vmem:[#allocation8 + $0x30] sm:$0xf]
    %v377 = vld [vmem:[#allocation8 + $0x34] sm:$0xf]
    %v378 = vld [vmem:[#allocation8 + $0x38] sm:$0xf]
    %v379 = vld [vmem:[#allocation8 + $0x3c] sm:$0xf]
    %v380 = vld [vmem:[%s6] sm:$0x1]
    %v382 = vlaneseq
    %v383 = vshrl.u32 %v382, 7
    %v384 = vsub.s32 0, %v383
    %v385 = vrot.slane %v380, %v384
    %v403 = vunpack.c.l.b16 %v364
    %v404 = vunpack.c.l.b16 %v365
    %v405 = vunpack.c.l.b16 %v366
    %v406 = vunpack.c.l.b16 %v367
    %v407 = vunpack.c.l.b16 %v368
    %v408 = vunpack.c.l.b16 %v369
    %v409 = vunpack.c.l.b16 %v370
    %v410 = vunpack.c.l.b16 %v371
    %v411 = vunpack.c.l.b16 %v372
    %v412 = vunpack.c.l.b16 %v373
    %v413 = vunpack.c.l.b16 %v374
    %v414 = vunpack.c.l.b16 %v375
    %v415 = vunpack.c.l.b16 %v376
    %v416 = vunpack.c.l.b16 %v377
    %v417 = vunpack.c.l.b16 %v378
    %v418 = vunpack.c.l.b16 %v379
    %v419 = vpack.c.b16 %v404, %v403
    %v420 = vpack.c.b16 %v406, %v405
    %v421 = vpack.c.b16 %v408, %v407
    %v422 = vpack.c.b16 %v410, %v409
    %v423 = vpack.c.b16 %v412, %v411
    %v424 = vpack.c.b16 %v414, %v413
    %v425 = vpack.c.b16 %v416, %v415
    %v426 = vpack.c.b16 %v418, %v417
    %435 = vmatprep.subr.bf16.mxu0 0
    %436 = vmatpush1.bf16.msra.mxu0 %v419
    %437 = vmatprep.subr.bf16.mxu0 0
    %438 = vmatpush1.bf16.msra.mxu0 %v420
    %439 = vmatprep.subr.bf16.mxu0 0
    %440 = vmatpush1.bf16.msra.mxu0 %v421
    %441 = vmatprep.subr.bf16.mxu0 0
    %442 = vmatpush1.bf16.msra.mxu0 %v422
    %443 = vmatprep.subr.bf16.mxu0 0
    %444 = vmatpush1.bf16.msra.mxu0 %v423
    %445 = vmatprep.subr.bf16.mxu0 0
    %446 = vmatpush1.bf16.msra.mxu0 %v424
    %447 = vmatprep.subr.bf16.mxu0 0
    %448 = vmatpush1.bf16.msra.mxu0 %v425
    %449 = vmatprep.subr.bf16.mxu0 0
    %450 = vmatpush1.bf16.msra.mxu0 %v426
    %451 = vmatprep.subr.bf16.mxu0 0
    %452 = vmatpush1.bf16.msra.mxu0 0
    %453 = vmatprep.subr.bf16.mxu0 0
    %454 = vmatpush1.bf16.msra.mxu0 0
    %455 = vmatprep.subr.bf16.mxu0 0
    %456 = vmatpush1.bf16.msra.mxu0 0
    %457 = vmatprep.subr.bf16.mxu0 0
    %458 = vmatpush1.bf16.msra.mxu0 0
    %459 = vmatprep.subr.bf16.mxu0 0
    %460 = vmatpush1.bf16.msra.mxu0 0
    %461 = vmatprep.subr.bf16.mxu0 0
    %462 = vmatpush1.bf16.msra.mxu0 0
    %463 = vmatprep.subr.bf16.mxu0 0
    %464 = vmatpush1.bf16.msra.mxu0 0
    %465 = vmatprep.subr.bf16.mxu0 0
    %466 = vmatpush1.bf16.msra.mxu0 0
    %467 = vmatprep.mubr.bf16.mxu0 0
    %468 = vmatmul.mubr.bf16.gmra.mrb[0].mxu0 %v363
    %v469 = vpop.f32.mrb[0].mxu0
    %v470 = vadd.f32 %v385, %v469
    %v471 = vpop.f32.mrb[0].mxu0
    %v472 = vpop.f32.mrb[0].mxu0
    %v473 = vpop.f32.mrb[0].mxu0
    %474 = vdwg.mxu0
    %v475 = vpack.c.bf16 %v470, %v470
    %v476 = vtanh.bf16.pop %v475
    %v477 = vld [vmem:[#allocation10] sm:$0xf]
    %v478 = vld [vmem:[#allocation10 + $0x4] sm:$0xf]
    %v479 = vld [vmem:[#allocation10 + $0x8] sm:$0xf]
    %v480 = vld [vmem:[#allocation10 + $0xc] sm:$0xf]
    %v481 = vld [vmem:[#allocation10 + $0x10] sm:$0xf]
    %v482 = vld [vmem:[#allocation10 + $0x14] sm:$0xf]
    %v483 = vld [vmem:[#allocation10 + $0x18] sm:$0xf]
    %v484 = vld [vmem:[#allocation10 + $0x1c] sm:$0xf]
    %v485 = vld [vmem:[#allocation10 + $0x20] sm:$0xf]
    %v486 = vld [vmem:[#allocation10 + $0x24] sm:$0xf]
    %v487 = vld [vmem:[#allocation10 + $0x28] sm:$0xf]
    %v488 = vld [vmem:[#allocation10 + $0x2c] sm:$0xf]
    %v489 = vld [vmem:[#allocation10 + $0x30] sm:$0xf]
    %v490 = vld [vmem:[#allocation10 + $0x34] sm:$0xf]
    %v491 = vld [vmem:[#allocation10 + $0x38] sm:$0xf]
    %v492 = vld [vmem:[#allocation10 + $0x3c] sm:$0xf]
    %v493 = vld [vmem:[%s8] sm:$0x1]
    %v495 = vlaneseq
    %v496 = vshrl.u32 %v495, 7
    %v497 = vsub.s32 0, %v496
    %v498 = vrot.slane %v493, %v497
    %v516 = vunpack.c.l.b16 %v477
    %v517 = vunpack.c.l.b16 %v478
    %v518 = vunpack.c.l.b16 %v479
    %v519 = vunpack.c.l.b16 %v480
    %v520 = vunpack.c.l.b16 %v481
    %v521 = vunpack.c.l.b16 %v482
    %v522 = vunpack.c.l.b16 %v483
    %v523 = vunpack.c.l.b16 %v484
    %v524 = vunpack.c.l.b16 %v485
    %v525 = vunpack.c.l.b16 %v486
    %v526 = vunpack.c.l.b16 %v487
    %v527 = vunpack.c.l.b16 %v488
    %v528 = vunpack.c.l.b16 %v489
    %v529 = vunpack.c.l.b16 %v490
    %v530 = vunpack.c.l.b16 %v491
    %v531 = vunpack.c.l.b16 %v492
    %v532 = vpack.c.b16 %v517, %v516
    %v533 = vpack.c.b16 %v519, %v518
    %v534 = vpack.c.b16 %v521, %v520
    %v535 = vpack.c.b16 %v523, %v522
    %v536 = vpack.c.b16 %v525, %v524
    %v537 = vpack.c.b16 %v527, %v526
    %v538 = vpack.c.b16 %v529, %v528
    %v539 = vpack.c.b16 %v531, %v530
    %548 = vmatprep.subr.bf16.mxu0 0
    %549 = vmatpush1.bf16.msra.mxu0 %v532
    %550 = vmatprep.subr.bf16.mxu0 0
    %551 = vmatpush1.bf16.msra.mxu0 %v533
    %552 = vmatprep.subr.bf16.mxu0 0
    %553 = vmatpush1.bf16.msra.mxu0 %v534
    %554 = vmatprep.subr.bf16.mxu0 0
    %555 = vmatpush1.bf16.msra.mxu0 %v535
    %556 = vmatprep.subr.bf16.mxu0 0
    %557 = vmatpush1.bf16.msra.mxu0 %v536
    %558 = vmatprep.subr.bf16.mxu0 0
    %559 = vmatpush1.bf16.msra.mxu0 %v537
    %560 = vmatprep.subr.bf16.mxu0 0
    %561 = vmatpush1.bf16.msra.mxu0 %v538
    %562 = vmatprep.subr.bf16.mxu0 0
    %563 = vmatpush1.bf16.msra.mxu0 %v539
    %564 = vmatprep.subr.bf16.mxu0 0
    %565 = vmatpush1.bf16.msra.mxu0 0
    %566 = vmatprep.subr.bf16.mxu0 0
    %567 = vmatpush1.bf16.msra.mxu0 0
    %568 = vmatprep.subr.bf16.mxu0 0
    %569 = vmatpush1.bf16.msra.mxu0 0
    %570 = vmatprep.subr.bf16.mxu0 0
    %571 = vmatpush1.bf16.msra.mxu0 0
    %572 = vmatprep.subr.bf16.mxu0 0
    %573 = vmatpush1.bf16.msra.mxu0 0
    %574 = vmatprep.subr.bf16.mxu0 0
    %575 = vmatpush1.bf16.msra.mxu0 0
    %576 = vmatprep.subr.bf16.mxu0 0
    %577 = vmatpush1.bf16.msra.mxu0 0
    %578 = vmatprep.subr.bf16.mxu0 0
    %579 = vmatpush1.bf16.msra.mxu0 0
    %580 = vmatprep.mubr.bf16.mxu0 0
    %581 = vmatmul.mubr.bf16.gmra.mrb[0].mxu0 %v476
    %v582 = vpop.f32.mrb[0].mxu0
    %v583 = vadd.f32 %v498, %v582
    %v584 = vpop.f32.mrb[0].mxu0
    %v585 = vpop.f32.mrb[0].mxu0
    %v586 = vpop.f32.mrb[0].mxu0
    %587 = vdwg.mxu0
    %588 = vst [vmem:[#allocation11] sm:$0xff] %v583
    // Predicated region
    $region58: #{student_forward.1} parent=1 // pred_check
      _
    $region59: #{student_forward.1} parent=1 // pred_check_branch
      %590 = sbr.rel (0) target = $region61
    $region60: #{student_forward.1} parent=1 // pred_region
      %s592 = ssub.s32 128, 128
      %593 = vsyncadd [#allocation4], %s592
      %s595 = sshll.u32 [#allocation11], 4
      %s596 = int_to_ptr.vmem [resolvable:$true] %s595
      %598 = dma.vmem_to_hbm [thread:$0]  %s596, 128, %s9, [#allocation4]
    $region61: #{student_forward.1} parent=1 // pred_fallthru
      _
    // Predicated region
    $region62: #{student_forward.1} parent=1 // pred_check
      _
    $region63: #{student_forward.1} parent=1 // pred_check_branch
      %600 = sbr.rel (0) target = $region65
    $region64: #{student_forward.1} parent=1 // pred_region
      %601 = dma.done [#allocation4], 128
    $region65: #{student_forward.1} parent=1 // pred_fallthru
      _
    %602 = vsyncpa [#allocation3], 1
    %603 = vsyncpa [#allocation6], 1
    %604 = vsyncpa [#allocation9], 1
    %605 = vsyncpa [#allocation4], 1

</llo_original>
